<compile_context>
chip_gen: v6e
topology: v6e:2x2x1
jax: 0.10.0
libtpu: 0.0.40
codegen_flags: <defaults>
</compile_context>

<pallas_src>
import jax
import jax.numpy as jnp
from jax.experimental import pallas as pl
from jax.experimental.pallas import tpu as pltpu

IN_FEATURES = 64
OUT_FEATURES = 1024


def linear_silu_kernel(x_ref, w_ref, b_ref, o_ref):
    # x_ref: (tm, K) bf16   w_ref: (K, N) bf16   b_ref: (1, N) f32   o_ref: (tm, N) f32
    v7 = jnp.dot(x_ref[...], w_ref[...], preferred_element_type=jnp.float32)
    v7 = v7 + b_ref[...]                      # bias folded into the f32 accumulator
    v8 = jax.nn.sigmoid(v7)                   # EUP transcendental; the VALU mul is free filler
    o_ref[...] = (v7 * v8).astype(o_ref.dtype)


def linear_silu(x, w, b, *, tm=512):
    """x: (M, 64), w: (64, 1024), b: (1024,) -> (M, 1024) of v7 * sigmoid(v7)."""
    M, K = x.shape
    Kw, N = w.shape
    assert K == Kw and b.shape == (N,)

    # bf16 storage for the HBM-dominant operands; f32 accumulation on the MXU.
    x_bf = x.astype(jnp.bfloat16)
    w_bf = w.astype(jnp.bfloat16)
    b2 = b.reshape(1, N).astype(jnp.float32)

    tm = min(tm, M)
    grid = (pl.cdiv(M, tm),)

    cost = pl.CostEstimate(
        flops=2 * M * K * N + 4 * M * N,
        transcendentals=M * N,
        bytes_accessed=2 * (M * K + K * N) + 4 * (N + M * N),
    )

    return pl.pallas_call(
        linear_silu_kernel,
        out_shape=jax.ShapeDtypeStruct((M, N), jnp.float32),
        grid=grid,
        in_specs=[
            pl.BlockSpec((tm, K), lambda i: (i, 0)),   # x tile streamed over M
            pl.BlockSpec((K, N), lambda i: (0, 0)),    # W resident (grid-invariant)
            pl.BlockSpec((1, N), lambda i: (0, 0)),    # bias resident
        ],
        out_specs=pl.BlockSpec((tm, N), lambda i: (i, 0)),
        compiler_params=pltpu.CompilerParams(
            dimension_semantics=("parallel",),          # v7x: split M across both TCs
        ),
        cost_estimate=cost,
    )(x_bf, w_bf, b2)


if __name__ == "__main__":
    key = jax.random.PRNGKey(0)
    kx, kw, kb = jax.random.split(key, 3)

    # Deterministic synthetic parameters matching nn.Linear(64, 1024) shapes.
    # torch weight is (out, in); store transposed (in, out) for the kernel.
    bound = 1.0 / jnp.sqrt(IN_FEATURES)
    w_t = jax.random.uniform(
        kw, (IN_FEATURES, OUT_FEATURES), jnp.float32, -bound, bound
    )
    bias = jax.random.uniform(kb, (OUT_FEATURES,), jnp.float32, -bound, bound)

    # Example input consistent with the module: last dim = 64, small batch.
    x = jax.random.normal(kx, (8, IN_FEATURES), jnp.float32)

    out = linear_silu(x, w_t, bias)
    out = jax.block_until_ready(out)

    # Reference check in plain JAX, using the same bf16-cast operands the kernel sees.
    v7 = x.astype(jnp.bfloat16).astype(jnp.float32) @ w_t.astype(jnp.bfloat16).astype(
        jnp.float32
    ) + bias
    ref = v7 * jax.nn.sigmoid(v7)
    assert out.shape == (8, OUT_FEATURES)
    assert out.dtype == jnp.float32
    assert jnp.allclose(out, ref, atol=5e-3, rtol=5e-3)

    print("KERNEL_OK")
</pallas_src>

<mosaic_0001>
module attributes {stable_mosaic.version = 11 : i64} {
  func.func @linear_silu_kernel(%arg0: i32, %arg1: memref<8x64xbf16, #tpu.memory_space<vmem>>, %arg2: memref<64x1024xbf16, #tpu.memory_space<vmem>>, %arg3: memref<1x1024xf32, #tpu.memory_space<vmem>>, %arg4: memref<8x1024xf32, #tpu.memory_space<vmem>>) attributes {dimension_semantics = [#tpu.dimension_semantics<parallel>], iteration_bounds = array<i64: 1>, scalar_prefetch = 0 : i64, scratch_operands = 0 : i64, tpu.core_type = #tpu.core_type<tc>, window_params = [{transform_indices = @transform_0, window_bounds = array<i64: 8, 64>}, {pipeline_mode = #tpu.pipeline_mode<synchronous>, transform_indices = @transform_1, window_bounds = array<i64: 64, 1024>}, {pipeline_mode = #tpu.pipeline_mode<synchronous>, transform_indices = @transform_2, window_bounds = array<i64: 1, 1024>}, {transform_indices = @transform_3, window_bounds = array<i64: 8, 1024>}]} {
    %c0 = arith.constant 0 : index
    %c0_0 = arith.constant 0 : index
    %0 = vector.load %arg1[%c0, %c0_0] : memref<8x64xbf16, #tpu.memory_space<vmem>>, vector<8x64xbf16>
    %c0_1 = arith.constant 0 : index
    %c0_2 = arith.constant 0 : index
    %1 = vector.load %arg2[%c0_1, %c0_2] : memref<64x1024xbf16, #tpu.memory_space<vmem>>, vector<64x1024xbf16>
    %cst = arith.constant dense<0.000000e+00> : vector<8x1024xf32>
    %2 = tpu.matmul %0, %1, %cst {dimension_numbers = #tpu.dot_dimension_numbers<[1], [0], [0], [1], [0, 0, 1, 1], [], []>} : vector<8x64xbf16>, vector<64x1024xbf16>, vector<8x1024xf32> -> vector<8x1024xf32>
    %c0_3 = arith.constant 0 : index
    %c0_4 = arith.constant 0 : index
    %3 = vector.load %arg3[%c0_3, %c0_4] : memref<1x1024xf32, #tpu.memory_space<vmem>>, vector<1x1024xf32>
    %4 = vector.broadcast %3 : vector<1x1024xf32> to vector<8x1024xf32>
    %5 = arith.addf %2, %4 : vector<8x1024xf32>
    %6 = arith.negf %5 : vector<8x1024xf32>
    %7 = math.exp %6 : vector<8x1024xf32>
    %cst_5 = arith.constant 1.000000e+00 : f32
    %8 = vector.broadcast %cst_5 : f32 to vector<8x1024xf32>
    %9 = arith.addf %8, %7 : vector<8x1024xf32>
    %10 = arith.divf %8, %9 : vector<8x1024xf32>
    %11 = arith.mulf %5, %10 : vector<8x1024xf32>
    %c0_6 = arith.constant 0 : index
    %c0_7 = arith.constant 0 : index
    %12 = vector.load %arg4[%c0_6, %c0_7] : memref<8x1024xf32, #tpu.memory_space<vmem>>, vector<8x1024xf32>
    tpu.vector_store %arg4[%c0_6, %c0_7], %11 {strides = array<i32>} : memref<8x1024xf32, #tpu.memory_space<vmem>>, vector<8x1024xf32>,
    return
  }
  func.func @transform_0(%arg0: i32) -> (i32, i32) {
    %c0_i32 = arith.constant 0 : i32
    %c0_i32_0 = arith.constant 0 : i32
    return %arg0, %c0_i32 : i32, i32
  }
  func.func @transform_1(%arg0: i32) -> (i32, i32) {
    %c0_i32 = arith.constant 0 : i32
    %c0_i32_0 = arith.constant 0 : i32
    %c0_i32_1 = arith.constant 0 : i32
    return %c0_i32, %c0_i32_0 : i32, i32
  }
  func.func @transform_2(%arg0: i32) -> (i32, i32) {
    %c0_i32 = arith.constant 0 : i32
    %c0_i32_0 = arith.constant 0 : i32
    %c0_i32_1 = arith.constant 0 : i32
    return %c0_i32, %c0_i32_0 : i32, i32
  }
  func.func @transform_3(%arg0: i32) -> (i32, i32) {
    %c0_i32 = arith.constant 0 : i32
    %c0_i32_0 = arith.constant 0 : i32
    return %arg0, %c0_i32 : i32, i32
  }
}

</mosaic_0001>

<llo_original>
// kernel: tpu_custom_call.1
$region0: #{tpu_custom_call.1}
  #allocation0 [shape = 'u32[]', space=smem, size = 0x4, offset = 0x4, fixed_abs, tag = 'smem constant byte address 0x4 - core index']
  #allocation1 [shape = 'u32[144,128]{1,0:T(1,128)}', space=vmem, size = 0x12000, scoped, tag = 'internal scratch']
  %s0 = inlined_call_operand.hbm [shape: bf16[8,64], index: 0, kind: input, shape index: {}]
  %s1 = inlined_call_operand.hbm [shape: bf16[64,1024], index: 1, kind: input, shape index: {}]
  %s2 = inlined_call_operand.hbm [shape: f32[1,1024], index: 2, kind: input, shape index: {}]
  %s3 = inlined_call_operand.hbm [shape: f32[8,1024], index: 3, kind: output, shape index: {}]
  %s4 = sld [smem:[#allocation0]]
  $region34: #{tpu_custom_call.1} parent=0
    _
  %s6 = ssub.s32 1, %s4
  %s7 = scalar_select 0, %s6, %s4
  $region1: #{tpu_custom_call.1} parent=0
    #allocation2 [shape = 'u8[2048]{0}', space=vmem, size = 0x800, scoped, tag = 'input window, operand 0, single buffered']
    #allocation3 [shape = 's32[1]{0}', space=sflag, size = 0x4, scoped, tag = 'scoped memory for tpu_custom_call.1']
    #allocation4 [shape = 's32[1]{0}', space=sflag, size = 0x4, scoped, tag = 'scoped memory for tpu_custom_call.1']
    #allocation5 [shape = 'u8[131072]{0}', space=vmem, size = 0x20000, scoped, tag = 'input window, operand 1, single buffered']
    #allocation6 [shape = 's32[1]{0}', space=sflag, size = 0x4, scoped, tag = 'scoped memory for tpu_custom_call.1']
    #allocation7 [shape = 'u8[4096]{0}', space=vmem, size = 0x1000, scoped, tag = 'input window, operand 2, single buffered']
    #allocation8 [shape = 'u8[32768]{0}', space=vmem, size = 0x8000, scoped, tag = 'output window, operand 0, single buffered']
    %8 = vsyncpa [#allocation3], 0
    %9 = vsyncpa [#allocation6], 0
    %10 = vsyncpa [#allocation4], 0
    // Predicated region
    $region2: #{tpu_custom_call.1} parent=1 // pred_check
      _
    $region3: #{tpu_custom_call.1} parent=1 // pred_check_branch
      %12 = sbr.rel (0) target = $region5
    $region4: #{tpu_custom_call.1} parent=1 // pred_region
      %s14 = ssub.s32 64, 64
      %15 = vsyncadd [#allocation3], %s14
      %s17 = sshll.u32 [#allocation2], 4
      %s18 = int_to_ptr.vmem [resolvable:$true] %s17
      %20 = dma.hbm_to_vmem [thread:$0]  %s0, 64, %s18, [#allocation3]
    $region5: #{tpu_custom_call.1} parent=1 // pred_fallthru
      _
    // Predicated region
    $region6: #{tpu_custom_call.1} parent=1 // pred_check
      _
    $region7: #{tpu_custom_call.1} parent=1 // pred_check_branch
      %22 = sbr.rel (0) target = $region9
    $region8: #{tpu_custom_call.1} parent=1 // pred_region
      %s24 = ssub.s32 4096, 4096
      %25 = vsyncadd [#allocation6], %s24
      %s26 = sshll.u32 [#allocation5], 4
      %s27 = int_to_ptr.vmem [resolvable:$true] %s26
      %32 = dma.hbm_to_vmem [thread:$0]  %s1, 4096, %s27, [#allocation6], 512, 512, 32
    $region9: #{tpu_custom_call.1} parent=1 // pred_fallthru
      _
    // Predicated region
    $region10: #{tpu_custom_call.1} parent=1 // pred_check
      _
    $region11: #{tpu_custom_call.1} parent=1 // pred_check_branch
      %34 = sbr.rel (0) target = $region13
    $region12: #{tpu_custom_call.1} parent=1 // pred_region
      %s36 = ssub.s32 128, 128
      %37 = vsyncadd [#allocation6], %s36
      %s39 = sshll.u32 [#allocation7], 4
      %s40 = int_to_ptr.vmem [resolvable:$true] %s39
      %42 = dma.hbm_to_vmem [thread:$0]  %s2, 128, %s40, [#allocation6]
    $region13: #{tpu_custom_call.1} parent=1 // pred_fallthru
      _
    // Predicated region
    $region14: #{tpu_custom_call.1} parent=1 // pred_check
      _
    $region15: #{tpu_custom_call.1} parent=1 // pred_check_branch
      %44 = sbr.rel (0) target = $region17
    $region16: #{tpu_custom_call.1} parent=1 // pred_region
      %45 = dma.done [#allocation3], 64
    $region17: #{tpu_custom_call.1} parent=1 // pred_fallthru
      _
    // Predicated region
    $region18: #{tpu_custom_call.1} parent=1 // pred_check
      _
    $region19: #{tpu_custom_call.1} parent=1 // pred_check_branch
      %47 = sbr.rel (0) target = $region21
    $region20: #{tpu_custom_call.1} parent=1 // pred_region
      %48 = dma.done [#allocation6], 4096
    $region21: #{tpu_custom_call.1} parent=1 // pred_fallthru
      _
    // Predicated region
    $region22: #{tpu_custom_call.1} parent=1 // pred_check
      _
    $region23: #{tpu_custom_call.1} parent=1 // pred_check_branch
      %50 = sbr.rel (0) target = $region25
    $region24: #{tpu_custom_call.1} parent=1 // pred_region
      %51 = dma.done [#allocation6], 128
    $region25: #{tpu_custom_call.1} parent=1 // pred_fallthru
      _
    %v53 = vld [vmem:[#allocation2] sm:$0xf]
    %v54 = vld [vmem:[#allocation5] sm:$0xff]
    %v55 = vld [vmem:[#allocation5 + $0x8] sm:$0xff]
    %v56 = vld [vmem:[#allocation5 + $0x10] sm:$0xff]
    %v57 = vld [vmem:[#allocation5 + $0x18] sm:$0xff]
    %v58 = vld [vmem:[#allocation5 + $0x20] sm:$0xff]
    %v59 = vld [vmem:[#allocation5 + $0x28] sm:$0xff]
    %v60 = vld [vmem:[#allocation5 + $0x30] sm:$0xff]
    %v61 = vld [vmem:[#allocation5 + $0x38] sm:$0xff]
    %v62 = vld [vmem:[#allocation5 + $0x40] sm:$0xff]
    %v63 = vld [vmem:[#allocation5 + $0x48] sm:$0xff]
    %v64 = vld [vmem:[#allocation5 + $0x50] sm:$0xff]
    %v65 = vld [vmem:[#allocation5 + $0x58] sm:$0xff]
    %v66 = vld [vmem:[#allocation5 + $0x60] sm:$0xff]
    %v67 = vld [vmem:[#allocation5 + $0x68] sm:$0xff]
    %v68 = vld [vmem:[#allocation5 + $0x70] sm:$0xff]
    %v69 = vld [vmem:[#allocation5 + $0x78] sm:$0xff]
    %v70 = vld [vmem:[#allocation5 + $0x80] sm:$0xff]
    %v71 = vld [vmem:[#allocation5 + $0x88] sm:$0xff]
    %v72 = vld [vmem:[#allocation5 + $0x90] sm:$0xff]
    %v73 = vld [vmem:[#allocation5 + $0x98] sm:$0xff]
    %v74 = vld [vmem:[#allocation5 + $0xa0] sm:$0xff]
    %v75 = vld [vmem:[#allocation5 + $0xa8] sm:$0xff]
    %v76 = vld [vmem:[#allocation5 + $0xb0] sm:$0xff]
    %v77 = vld [vmem:[#allocation5 + $0xb8] sm:$0xff]
    %v78 = vld [vmem:[#allocation5 + $0xc0] sm:$0xff]
    %v79 = vld [vmem:[#allocation5 + $0xc8] sm:$0xff]
    %v80 = vld [vmem:[#allocation5 + $0xd0] sm:$0xff]
    %v81 = vld [vmem:[#allocation5 + $0xd8] sm:$0xff]
    %v82 = vld [vmem:[#allocation5 + $0xe0] sm:$0xff]
    %v83 = vld [vmem:[#allocation5 + $0xe8] sm:$0xff]
    %v84 = vld [vmem:[#allocation5 + $0xf0] sm:$0xff]
    %v85 = vld [vmem:[#allocation5 + $0xf8] sm:$0xff]
    %v86 = vld [vmem:[#allocation7] sm:$0xff]
    %v88 = vlaneseq
    %v89 = vshrl.u32 %v88, 7
    %v90 = vsub.s32 0, %v89
    %v91 = vrot.slane %v86, %v90
    %v92 = vlaneseq
    %v93 = vshrl.u32 %v92, 7
    %v94 = vsub.s32 1, %v93
    %v95 = vrot.slane %v86, %v94
    %v96 = vlaneseq
    %v97 = vshrl.u32 %v96, 7
    %v98 = vsub.s32 2, %v97
    %v99 = vrot.slane %v86, %v98
    %v100 = vlaneseq
    %v101 = vshrl.u32 %v100, 7
    %v102 = vsub.s32 3, %v101
    %v103 = vrot.slane %v86, %v102
    %v104 = vlaneseq
    %v105 = vshrl.u32 %v104, 7
    %v106 = vsub.s32 4, %v105
    %v107 = vrot.slane %v86, %v106
    %v108 = vlaneseq
    %v109 = vshrl.u32 %v108, 7
    %v110 = vsub.s32 5, %v109
    %v111 = vrot.slane %v86, %v110
    %v112 = vlaneseq
    %v113 = vshrl.u32 %v112, 7
    %v114 = vsub.s32 6, %v113
    %v115 = vrot.slane %v86, %v114
    %v116 = vlaneseq
    %v117 = vshrl.u32 %v116, 7
    %v118 = vsub.s32 7, %v117
    %v119 = vrot.slane %v86, %v118
    %v160 = vunpack.c.l.b16 %v54
    %v161 = vunpack.c.h.b16 %v54
    %v162 = vunpack.c.l.b16 %v55
    %v163 = vunpack.c.h.b16 %v55
    %v164 = vunpack.c.l.b16 %v56
    %v165 = vunpack.c.h.b16 %v56
    %v166 = vunpack.c.l.b16 %v57
    %v167 = vunpack.c.h.b16 %v57
    %v168 = vunpack.c.l.b16 %v58
    %v169 = vunpack.c.h.b16 %v58
    %v170 = vunpack.c.l.b16 %v59
    %v171 = vunpack.c.h.b16 %v59
    %v172 = vunpack.c.l.b16 %v60
    %v173 = vunpack.c.h.b16 %v60
    %v174 = vunpack.c.l.b16 %v61
    %v175 = vunpack.c.h.b16 %v61
    %v176 = vunpack.c.l.b16 %v62
    %v177 = vunpack.c.h.b16 %v62
    %v178 = vunpack.c.l.b16 %v63
    %v179 = vunpack.c.h.b16 %v63
    %v180 = vunpack.c.l.b16 %v64
    %v181 = vunpack.c.h.b16 %v64
    %v182 = vunpack.c.l.b16 %v65
    %v183 = vunpack.c.h.b16 %v65
    %v184 = vunpack.c.l.b16 %v66
    %v185 = vunpack.c.h.b16 %v66
    %v186 = vunpack.c.l.b16 %v67
    %v187 = vunpack.c.h.b16 %v67
    %v188 = vunpack.c.l.b16 %v68
    %v189 = vunpack.c.h.b16 %v68
    %v190 = vunpack.c.l.b16 %v69
    %v191 = vunpack.c.h.b16 %v69
    %v192 = vunpack.c.l.b16 %v70
    %v193 = vunpack.c.h.b16 %v70
    %v194 = vunpack.c.l.b16 %v71
    %v195 = vunpack.c.h.b16 %v71
    %v196 = vunpack.c.l.b16 %v72
    %v197 = vunpack.c.h.b16 %v72
    %v198 = vunpack.c.l.b16 %v73
    %v199 = vunpack.c.h.b16 %v73
    %v200 = vunpack.c.l.b16 %v74
    %v201 = vunpack.c.h.b16 %v74
    %v202 = vunpack.c.l.b16 %v75
    %v203 = vunpack.c.h.b16 %v75
    %v204 = vunpack.c.l.b16 %v76
    %v205 = vunpack.c.h.b16 %v76
    %v206 = vunpack.c.l.b16 %v77
    %v207 = vunpack.c.h.b16 %v77
    %v208 = vunpack.c.l.b16 %v78
    %v209 = vunpack.c.h.b16 %v78
    %v210 = vunpack.c.l.b16 %v79
    %v211 = vunpack.c.h.b16 %v79
    %v212 = vunpack.c.l.b16 %v80
    %v213 = vunpack.c.h.b16 %v80
    %v214 = vunpack.c.l.b16 %v81
    %v215 = vunpack.c.h.b16 %v81
    %v216 = vunpack.c.l.b16 %v82
    %v217 = vunpack.c.h.b16 %v82
    %v218 = vunpack.c.l.b16 %v83
    %v219 = vunpack.c.h.b16 %v83
    %v220 = vunpack.c.l.b16 %v84
    %v221 = vunpack.c.h.b16 %v84
    %v222 = vunpack.c.l.b16 %v85
    %v223 = vunpack.c.h.b16 %v85
    %v224 = vpack.c.b16 %v168, %v160
    %v225 = vpack.c.b16 %v169, %v161
    %v226 = vpack.c.b16 %v170, %v162
    %v227 = vpack.c.b16 %v171, %v163
    %v228 = vpack.c.b16 %v172, %v164
    %v229 = vpack.c.b16 %v173, %v165
    %v230 = vpack.c.b16 %v174, %v166
    %v231 = vpack.c.b16 %v175, %v167
    %v232 = vpack.c.b16 %v184, %v176
    %v233 = vpack.c.b16 %v185, %v177
    %v234 = vpack.c.b16 %v186, %v178
    %v235 = vpack.c.b16 %v187, %v179
    %v236 = vpack.c.b16 %v188, %v180
    %v237 = vpack.c.b16 %v189, %v181
    %v238 = vpack.c.b16 %v190, %v182
    %v239 = vpack.c.b16 %v191, %v183
    %v240 = vpack.c.b16 %v200, %v192
    %v241 = vpack.c.b16 %v201, %v193
    %v242 = vpack.c.b16 %v202, %v194
    %v243 = vpack.c.b16 %v203, %v195
    %v244 = vpack.c.b16 %v204, %v196
    %v245 = vpack.c.b16 %v205, %v197
    %v246 = vpack.c.b16 %v206, %v198
    %v247 = vpack.c.b16 %v207, %v199
    %v248 = vpack.c.b16 %v216, %v208
    %v249 = vpack.c.b16 %v217, %v209
    %v250 = vpack.c.b16 %v218, %v210
    %v251 = vpack.c.b16 %v219, %v211
    %v252 = vpack.c.b16 %v220, %v212
    %v253 = vpack.c.b16 %v221, %v213
    %v254 = vpack.c.b16 %v222, %v214
    %v255 = vpack.c.b16 %v223, %v215
    %vm288 = vcmask 523264
    %v290 = vsel %vm288, %v53, 0
    %292 = vmatprep.subr.bf16.mxu0 0
    %293 = vmatpush1.bf16.msra.mxu0 0
    %294 = vmatprep.subr.bf16.mxu0 0
    %295 = vmatpush1.bf16.msra.mxu0 0
    %296 = vmatprep.subr.bf16.mxu0 0
    %297 = vmatpush1.bf16.msra.mxu0 0
    %298 = vmatprep.subr.bf16.mxu0 0
    %299 = vmatpush1.bf16.msra.mxu0 0
    %300 = vmatprep.subr.bf16.mxu0 %v249
    %301 = vmatpush1.bf16.msra.mxu0 %v248
    %302 = vmatprep.subr.bf16.mxu0 %v241
    %303 = vmatpush1.bf16.msra.mxu0 %v240
    %304 = vmatprep.subr.bf16.mxu0 %v233
    %305 = vmatpush1.bf16.msra.mxu0 %v232
    %306 = vmatprep.subr.bf16.mxu0 %v225
    %307 = vmatpush1.bf16.msra.mxu0 %v224
    %308 = vmatprep.subr.bf16.mxu0 0
    %309 = vmatpush2.bf16.msra.mxu0 0
    %310 = vmatprep.subr.bf16.mxu0 0
    %311 = vmatpush2.bf16.msra.mxu0 0
    %312 = vmatprep.subr.bf16.mxu0 0
    %313 = vmatpush2.bf16.msra.mxu0 0
    %314 = vmatprep.subr.bf16.mxu0 0
    %315 = vmatpush2.bf16.msra.mxu0 0
    %316 = vmatprep.subr.bf16.mxu0 0
    %317 = vmatpush2.bf16.msra.mxu0 0
    %318 = vmatprep.subr.bf16.mxu0 0
    %319 = vmatpush2.bf16.msra.mxu0 0
    %320 = vmatprep.subr.bf16.mxu0 0
    %321 = vmatpush2.bf16.msra.mxu0 0
    %322 = vmatprep.subr.bf16.mxu0 0
    %323 = vmatpush2.bf16.msra.mxu0 0
    %324 = vmatprep.mubr.bf16.mxu0 0
    %325 = vmatmul.mubr.bf16.gmra.mxu0 %v290
    %v326 = vpop.f32.mrf.mxu0
    %v327 = vadd.f32 %v91, %v326
    %v328 = vpop.f32.mrf.mxu0
    %v329 = vadd.f32 %v95, %v328
    %v330 = vpop.f32.mrf.mxu0
    %v331 = vpop.f32.mrf.mxu0
    %332 = vdwg.mxu0
    %333 = vmatprep.subr.bf16.mxu0 0
    %334 = vmatpush1.bf16.msra.mxu0 0
    %335 = vmatprep.subr.bf16.mxu0 0
    %336 = vmatpush1.bf16.msra.mxu0 0
    %337 = vmatprep.subr.bf16.mxu0 0
    %338 = vmatpush1.bf16.msra.mxu0 0
    %339 = vmatprep.subr.bf16.mxu0 0
    %340 = vmatpush1.bf16.msra.mxu0 0
    %341 = vmatprep.subr.bf16.mxu0 %v251
    %342 = vmatpush1.bf16.msra.mxu0 %v250
    %343 = vmatprep.subr.bf16.mxu0 %v243
    %344 = vmatpush1.bf16.msra.mxu0 %v242
    %345 = vmatprep.subr.bf16.mxu0 %v235
    %346 = vmatpush1.bf16.msra.mxu0 %v234
    %347 = vmatprep.subr.bf16.mxu0 %v227
    %348 = vmatpush1.bf16.msra.mxu0 %v226
    %349 = vmatprep.subr.bf16.mxu0 0
    %350 = vmatpush2.bf16.msra.mxu0 0
    %351 = vmatprep.subr.bf16.mxu0 0
    %352 = vmatpush2.bf16.msra.mxu0 0
    %353 = vmatprep.subr.bf16.mxu0 0
    %354 = vmatpush2.bf16.msra.mxu0 0
    %355 = vmatprep.subr.bf16.mxu0 0
    %356 = vmatpush2.bf16.msra.mxu0 0
    %357 = vmatprep.subr.bf16.mxu0 0
    %358 = vmatpush2.bf16.msra.mxu0 0
    %359 = vmatprep.subr.bf16.mxu0 0
    %360 = vmatpush2.bf16.msra.mxu0 0
    %361 = vmatprep.subr.bf16.mxu0 0
    %362 = vmatpush2.bf16.msra.mxu0 0
    %363 = vmatprep.subr.bf16.mxu0 0
    %364 = vmatpush2.bf16.msra.mxu0 0
    %365 = vmatprep.mubr.bf16.mxu0 0
    %366 = vmatmul.mubr.bf16.gmra.mxu0 %v290
    %v367 = vpop.f32.mrf.mxu0
    %v368 = vadd.f32 %v99, %v367
    %v369 = vpop.f32.mrf.mxu0
    %v370 = vadd.f32 %v103, %v369
    %v371 = vpop.f32.mrf.mxu0
    %v372 = vpop.f32.mrf.mxu0
    %373 = vdwg.mxu0
    %374 = vmatprep.subr.bf16.mxu0 0
    %375 = vmatpush1.bf16.msra.mxu0 0
    %376 = vmatprep.subr.bf16.mxu0 0
    %377 = vmatpush1.bf16.msra.mxu0 0
    %378 = vmatprep.subr.bf16.mxu0 0
    %379 = vmatpush1.bf16.msra.mxu0 0
    %380 = vmatprep.subr.bf16.mxu0 0
    %381 = vmatpush1.bf16.msra.mxu0 0
    %382 = vmatprep.subr.bf16.mxu0 %v253
    %383 = vmatpush1.bf16.msra.mxu0 %v252
    %384 = vmatprep.subr.bf16.mxu0 %v245
    %385 = vmatpush1.bf16.msra.mxu0 %v244
    %386 = vmatprep.subr.bf16.mxu0 %v237
    %387 = vmatpush1.bf16.msra.mxu0 %v236
    %388 = vmatprep.subr.bf16.mxu0 %v229
    %389 = vmatpush1.bf16.msra.mxu0 %v228
    %390 = vmatprep.subr.bf16.mxu0 0
    %391 = vmatpush2.bf16.msra.mxu0 0
    %392 = vmatprep.subr.bf16.mxu0 0
    %393 = vmatpush2.bf16.msra.mxu0 0
    %394 = vmatprep.subr.bf16.mxu0 0
    %395 = vmatpush2.bf16.msra.mxu0 0
    %396 = vmatprep.subr.bf16.mxu0 0
    %397 = vmatpush2.bf16.msra.mxu0 0
    %398 = vmatprep.subr.bf16.mxu0 0
    %399 = vmatpush2.bf16.msra.mxu0 0
    %400 = vmatprep.subr.bf16.mxu0 0
    %401 = vmatpush2.bf16.msra.mxu0 0
    %402 = vmatprep.subr.bf16.mxu0 0
    %403 = vmatpush2.bf16.msra.mxu0 0
    %404 = vmatprep.subr.bf16.mxu0 0
    %405 = vmatpush2.bf16.msra.mxu0 0
    %406 = vmatprep.mubr.bf16.mxu0 0
    %407 = vmatmul.mubr.bf16.gmra.mxu0 %v290
    %v408 = vpop.f32.mrf.mxu0
    %v409 = vadd.f32 %v107, %v408
    %v410 = vpop.f32.mrf.mxu0
    %v411 = vadd.f32 %v111, %v410
    %v412 = vpop.f32.mrf.mxu0
    %v413 = vpop.f32.mrf.mxu0
    %414 = vdwg.mxu0
    %415 = vmatprep.subr.bf16.mxu0 0
    %416 = vmatpush1.bf16.msra.mxu0 0
    %417 = vmatprep.subr.bf16.mxu0 0
    %418 = vmatpush1.bf16.msra.mxu0 0
    %419 = vmatprep.subr.bf16.mxu0 0
    %420 = vmatpush1.bf16.msra.mxu0 0
    %421 = vmatprep.subr.bf16.mxu0 0
    %422 = vmatpush1.bf16.msra.mxu0 0
    %423 = vmatprep.subr.bf16.mxu0 %v255
    %424 = vmatpush1.bf16.msra.mxu0 %v254
    %425 = vmatprep.subr.bf16.mxu0 %v247
    %426 = vmatpush1.bf16.msra.mxu0 %v246
    %427 = vmatprep.subr.bf16.mxu0 %v239
    %428 = vmatpush1.bf16.msra.mxu0 %v238
    %429 = vmatprep.subr.bf16.mxu0 %v231
    %430 = vmatpush1.bf16.msra.mxu0 %v230
    %431 = vmatprep.subr.bf16.mxu0 0
    %432 = vmatpush2.bf16.msra.mxu0 0
    %433 = vmatprep.subr.bf16.mxu0 0
    %434 = vmatpush2.bf16.msra.mxu0 0
    %435 = vmatprep.subr.bf16.mxu0 0
    %436 = vmatpush2.bf16.msra.mxu0 0
    %437 = vmatprep.subr.bf16.mxu0 0
    %438 = vmatpush2.bf16.msra.mxu0 0
    %439 = vmatprep.subr.bf16.mxu0 0
    %440 = vmatpush2.bf16.msra.mxu0 0
    %441 = vmatprep.subr.bf16.mxu0 0
    %442 = vmatpush2.bf16.msra.mxu0 0
    %443 = vmatprep.subr.bf16.mxu0 0
    %444 = vmatpush2.bf16.msra.mxu0 0
    %445 = vmatprep.subr.bf16.mxu0 0
    %446 = vmatpush2.bf16.msra.mxu0 0
    %447 = vmatprep.mubr.bf16.mxu0 0
    %448 = vmatmul.mubr.bf16.gmra.mxu0 %v290
    %v449 = vpop.f32.mrf.mxu0
    %v450 = vadd.f32 %v115, %v449
    %v451 = vpop.f32.mrf.mxu0
    %v452 = vadd.f32 %v119, %v451
    %v453 = vpop.f32.mrf.mxu0
    %v454 = vpop.f32.mrf.mxu0
    %455 = vdwg.mxu0
    %v456 = vxor.u32 %v327, 2147483648
    %v457 = vxor.u32 %v329, 2147483648
    %v458 = vxor.u32 %v368, 2147483648
    %v459 = vxor.u32 %v370, 2147483648
    %v460 = vxor.u32 %v409, 2147483648
    %v461 = vxor.u32 %v411, 2147483648
    %v462 = vxor.u32 %v450, 2147483648
    %v463 = vxor.u32 %v452, 2147483648
    %v464 = vmul.f32 %v456, 1.442695
    %v465 = vpow.pop %v464
    %v466 = vmul.f32 %v457, 1.442695
    %v467 = vpow.pop %v466
    %v468 = vmul.f32 %v458, 1.442695
    %v469 = vpow.pop %v468
    %v470 = vmul.f32 %v459, 1.442695
    %v471 = vpow.pop %v470
    %v472 = vmul.f32 %v460, 1.442695
    %v473 = vpow.pop %v472
    %v474 = vmul.f32 %v461, 1.442695
    %v475 = vpow.pop %v474
    %v476 = vmul.f32 %v462, 1.442695
    %v477 = vpow.pop %v476
    %v478 = vmul.f32 %v463, 1.442695
    %v479 = vpow.pop %v478
    %v480 = vadd.f32 %v465, 1.0
    %v481 = vadd.f32 %v467, 1.0
    %v482 = vadd.f32 %v469, 1.0
    %v483 = vadd.f32 %v471, 1.0
    %v484 = vadd.f32 %v473, 1.0
    %v485 = vadd.f32 %v475, 1.0
    %v486 = vadd.f32 %v477, 1.0
    %v487 = vadd.f32 %v479, 1.0
    %v488 = vrcp.pop %v480
    %v489 = vmul.f32 1.0, %v488
    %v490 = vrcp.pop %v481
    %v491 = vmul.f32 1.0, %v490
    %v492 = vrcp.pop %v482
    %v493 = vmul.f32 1.0, %v492
    %v494 = vrcp.pop %v483
    %v495 = vmul.f32 1.0, %v494
    %v496 = vrcp.pop %v484
    %v497 = vmul.f32 1.0, %v496
    %v498 = vrcp.pop %v485
    %v499 = vmul.f32 1.0, %v498
    %v500 = vrcp.pop %v486
    %v501 = vmul.f32 1.0, %v500
    %v502 = vrcp.pop %v487
    %v503 = vmul.f32 1.0, %v502
    %v504 = vmul.f32 %v327, %v489
    %v505 = vmul.f32 %v329, %v491
    %v506 = vmul.f32 %v368, %v493
    %v507 = vmul.f32 %v370, %v495
    %v508 = vmul.f32 %v409, %v497
    %v509 = vmul.f32 %v411, %v499
    %v510 = vmul.f32 %v450, %v501
    %v511 = vmul.f32 %v452, %v503
    %512 = vst [vmem:[#allocation8] sm:$0xff] %v504
    %513 = vst [vmem:[#allocation8 + $0x8] sm:$0xff] %v505
    %514 = vst [vmem:[#allocation8 + $0x10] sm:$0xff] %v506
    %515 = vst [vmem:[#allocation8 + $0x18] sm:$0xff] %v507
    %516 = vst [vmem:[#allocation8 + $0x20] sm:$0xff] %v508
    %517 = vst [vmem:[#allocation8 + $0x28] sm:$0xff] %v509
    %518 = vst [vmem:[#allocation8 + $0x30] sm:$0xff] %v510
    %519 = vst [vmem:[#allocation8 + $0x38] sm:$0xff] %v511
    // Predicated region
    $region26: #{tpu_custom_call.1} parent=1 // pred_check
      _
    $region27: #{tpu_custom_call.1} parent=1 // pred_check_branch
      %521 = sbr.rel (0) target = $region29
    $region28: #{tpu_custom_call.1} parent=1 // pred_region
      %s523 = ssub.s32 1024, 1024
      %524 = vsyncadd [#allocation4], %s523
      %s526 = sshll.u32 [#allocation8], 4
      %s527 = int_to_ptr.vmem [resolvable:$true] %s526
      %529 = dma.vmem_to_hbm [thread:$0]  %s527, 1024, %s3, [#allocation4]
    $region29: #{tpu_custom_call.1} parent=1 // pred_fallthru
      _
    // Predicated region
    $region30: #{tpu_custom_call.1} parent=1 // pred_check
      _
    $region31: #{tpu_custom_call.1} parent=1 // pred_check_branch
      %531 = sbr.rel (0) target = $region33
    $region32: #{tpu_custom_call.1} parent=1 // pred_region
      %532 = dma.done [#allocation4], 1024
    $region33: #{tpu_custom_call.1} parent=1 // pred_fallthru
      _
    %533 = vsyncpa [#allocation3], 1
    %534 = vsyncpa [#allocation6], 1
    %535 = vsyncpa [#allocation4], 1

</llo_original>
